<compile_context>
chip_gen: v6e
topology: v6e:2x2x1
jax: 0.10.0
libtpu: 0.0.40
codegen_flags: <defaults>
</compile_context>

<pallas_src>
import jax
import jax.numpy as jnp
from jax.experimental import pallas as pl
from jax.experimental.pallas import tpu as pltpu


# ---------------------------------------------------------------------------
# Kernel: fused Linear + Tanh.
#   x_ref: (Bblk, F)   wt_ref: (F, D)   b_ref: (1, D)   o_ref: (Bblk, D)
# ---------------------------------------------------------------------------
def _rl_projection_kernel(x_ref, wt_ref, b_ref, o_ref):
    y = jnp.dot(x_ref[...], wt_ref[...], preferred_element_type=jnp.float32)
    o_ref[...] = jnp.tanh(y + b_ref[...]).astype(o_ref.dtype)


def rl_projection(x, weight, bias, *, block_b=256):
    """RLProjection forward: tanh(x @ weight.T + bias).

    x:      (B, F)  float32
    weight: (D, F)  float32  -- PyTorch nn.Linear layout (out_features, in_features)
    bias:   (D,)    float32
    returns (B, D)  float32
    """
    B, F = x.shape
    D = weight.shape[0]

    # One-time layout prep outside the kernel: contraction dim on sublanes,
    # output dim on lanes; bias as a broadcastable row.
    w_t = jnp.transpose(weight)      # (F, D)
    b2 = bias.reshape(1, D)          # (1, D)

    if B <= block_b:
        # Whole problem resident in VMEM: single invocation, no grid.
        return pl.pallas_call(
            _rl_projection_kernel,
            out_shape=jax.ShapeDtypeStruct((B, D), jnp.float32),
        )(x, w_t, b2)

    # Large-batch path: stream batch tiles, keep weights/bias resident.
    grid = (pl.cdiv(B, block_b),)
    return pl.pallas_call(
        _rl_projection_kernel,
        out_shape=jax.ShapeDtypeStruct((B, D), jnp.float32),
        grid_spec=pltpu.PrefetchScalarGridSpec(
            num_scalar_prefetch=0,
            grid=grid,
            in_specs=[
                pl.BlockSpec((block_b, F), lambda i: (i, 0)),
                pl.BlockSpec((F, D), lambda i: (0, 0)),   # resident across grid
                pl.BlockSpec((1, D), lambda i: (0, 0)),   # resident across grid
            ],
            out_specs=pl.BlockSpec((block_b, D), lambda i: (i, 0)),
        ),
        compiler_params=pltpu.CompilerParams(
            dimension_semantics=("parallel",),
        ),
    )(x, w_t, b2)


# ---------------------------------------------------------------------------
# Parameter construction mirroring `weight_init`:
#   nn.init.orthogonal_(weight), bias filled with 0.0
# ---------------------------------------------------------------------------
def make_rl_projection_params(key, in_features, out_dim):
    a = jax.random.normal(key, (in_features, out_dim), jnp.float32)
    q, r = jnp.linalg.qr(a)                       # q: (F, D) orthonormal columns
    q = q * jnp.sign(jnp.diagonal(r))[None, :]    # sign fix, as in torch orthogonal_
    weight = q.T.astype(jnp.float32)              # (D, F) PyTorch Linear layout
    bias = jnp.zeros((out_dim,), jnp.float32)
    return weight, bias


# ---------------------------------------------------------------------------
# Pure-JAX reference for verification.
# ---------------------------------------------------------------------------
def reference_forward(x, weight, bias):
    y = jnp.dot(x, weight.T, precision=jax.lax.Precision.HIGHEST) + bias
    return jnp.tanh(y)


if __name__ == "__main__":
    key = jax.random.PRNGKey(0)
    kparam, kx = jax.random.split(key)

    # Small shapes consistent with the module: in_shape=(288,) (e.g. flattened
    # 32x3x3 CNN feature map), out_dim=32, batch=2.
    B, F, D = 2, 288, 32

    weight, bias = make_rl_projection_params(kparam, F, D)
    x = jax.random.normal(kx, (B, F), jnp.float32)

    out = jax.block_until_ready(rl_projection(x, weight, bias))
    assert out.shape == (B, D), out.shape

    ref = jax.block_until_ready(reference_forward(x, weight, bias))
    err = float(jnp.max(jnp.abs(out - ref)))
    assert err < 1e-2, f"max abs err {err}"

    print("KERNEL_OK")
</pallas_src>

<mosaic_0001>
module attributes {stable_mosaic.version = 11 : i64} {
  func.func @_rl_projection_kernel(%arg0: memref<2x288xf32, #tpu.memory_space<vmem>>, %arg1: memref<288x32xf32, #tpu.memory_space<vmem>>, %arg2: memref<1x32xf32, #tpu.memory_space<vmem>>, %arg3: memref<2x32xf32, #tpu.memory_space<vmem>>) attributes {dimension_semantics = [], scalar_prefetch = 0 : i64, scratch_operands = 0 : i64, tpu.core_type = #tpu.core_type<tc>} {
    %c0 = arith.constant 0 : index
    %c0_0 = arith.constant 0 : index
    %0 = vector.load %arg0[%c0, %c0_0] : memref<2x288xf32, #tpu.memory_space<vmem>>, vector<2x288xf32>
    %c0_1 = arith.constant 0 : index
    %c0_2 = arith.constant 0 : index
    %1 = vector.load %arg1[%c0_1, %c0_2] : memref<288x32xf32, #tpu.memory_space<vmem>>, vector<288x32xf32>
    %cst = arith.constant dense<0.000000e+00> : vector<2x32xf32>
    %2 = tpu.matmul %0, %1, %cst {dimension_numbers = #tpu.dot_dimension_numbers<[1], [0], [0], [1], [0, 0, 1, 1], [], []>} : vector<2x288xf32>, vector<288x32xf32>, vector<2x32xf32> -> vector<2x32xf32>
    %c0_3 = arith.constant 0 : index
    %c0_4 = arith.constant 0 : index
    %3 = vector.load %arg2[%c0_3, %c0_4] : memref<1x32xf32, #tpu.memory_space<vmem>>, vector<1x32xf32>
    %4 = vector.broadcast %3 : vector<1x32xf32> to vector<2x32xf32>
    %5 = arith.addf %2, %4 : vector<2x32xf32>
    %6 = math.tanh %5 : vector<2x32xf32>
    %c0_5 = arith.constant 0 : index
    %c0_6 = arith.constant 0 : index
    %7 = vector.load %arg3[%c0_5, %c0_6] : memref<2x32xf32, #tpu.memory_space<vmem>>, vector<2x32xf32>
    tpu.vector_store %arg3[%c0_5, %c0_6], %6 {strides = array<i32>} : memref<2x32xf32, #tpu.memory_space<vmem>>, vector<2x32xf32>,
    return
  }
}

</mosaic_0001>

<llo_original>
// kernel: tpu_custom_call.1
$region0: #{tpu_custom_call.1}
  #allocation0 [shape = 'u32[]', space=smem, size = 0x4, offset = 0x4, fixed_abs, tag = 'smem constant byte address 0x4 - core index']
  #allocation1 [shape = 'u32[144,128]{1,0:T(1,128)}', space=vmem, size = 0x12000, scoped, tag = 'internal scratch']
  %s0 = inlined_call_operand.vmem [shape: f32[2,288], index: 0, kind: input, shape index: {}]
  %s1 = inlined_call_operand.vmem [shape: f32[288,32], index: 1, kind: input, shape index: {}]
  %s2 = inlined_call_operand.vmem [shape: f32[1,32], index: 2, kind: input, shape index: {}]
  %s3 = inlined_call_operand.hbm [shape: f32[2,32], index: 3, kind: output, shape index: {}]
  %s4 = sld [smem:[#allocation0]]
  $region22: #{tpu_custom_call.1} parent=0
    _
  %s6 = ssub.s32 1, %s4
  %s7 = scalar_select 0, %s6, %s4
  $region1: #{tpu_custom_call.1} parent=0
    #allocation2 [shape = 'u8[1024]{0}', space=vmem, size = 0x400, scoped, tag = 'output window, operand 0, single buffered']
    #allocation3 [shape = 's32[1]{0}', space=sflag, size = 0x4, scoped, tag = 'scoped memory for tpu_custom_call.1']
    %8 = vsyncpa [#allocation3], 0
    // Predicated region
    $region2: #{tpu_custom_call.1} parent=1 // pred_check
      _
    $region3: #{tpu_custom_call.1} parent=1 // pred_check_branch
      %10 = sbr.rel (0) target = $region5
    $region4: #{tpu_custom_call.1} parent=1 // pred_region
      _
    $region5: #{tpu_custom_call.1} parent=1 // pred_fallthru
      _
    // Predicated region
    $region6: #{tpu_custom_call.1} parent=1 // pred_check
      _
    $region7: #{tpu_custom_call.1} parent=1 // pred_check_branch
      %12 = sbr.rel (0) target = $region9
    $region8: #{tpu_custom_call.1} parent=1 // pred_region
      _
    $region9: #{tpu_custom_call.1} parent=1 // pred_fallthru
      _
    // Predicated region
    $region10: #{tpu_custom_call.1} parent=1 // pred_check
      _
    $region11: #{tpu_custom_call.1} parent=1 // pred_check_branch
      %14 = sbr.rel (0) target = $region13
    $region12: #{tpu_custom_call.1} parent=1 // pred_region
      _
    $region13: #{tpu_custom_call.1} parent=1 // pred_fallthru
      _
    %v15 = vld [vmem:[%s0] sm:$0x3f]
    %v16 = vld [vmem:[%s1] sm:$0xff]
    %v17 = vld [vmem:[%s1 + $0x8] sm:$0xff]
    %v18 = vld [vmem:[%s1 + $0x10] sm:$0xff]
    %v19 = vld [vmem:[%s1 + $0x18] sm:$0xff]
    %v20 = vld [vmem:[%s1 + $0x20] sm:$0xff]
    %v21 = vld [vmem:[%s1 + $0x28] sm:$0xff]
    %v22 = vld [vmem:[%s1 + $0x30] sm:$0xff]
    %v23 = vld [vmem:[%s1 + $0x38] sm:$0xff]
    %v24 = vld [vmem:[%s1 + $0x40] sm:$0xff]
    %v25 = vld [vmem:[%s1 + $0x48] sm:$0xff]
    %v26 = vld [vmem:[%s1 + $0x50] sm:$0xff]
    %v27 = vld [vmem:[%s1 + $0x58] sm:$0xff]
    %v28 = vld [vmem:[%s1 + $0x60] sm:$0xff]
    %v29 = vld [vmem:[%s1 + $0x68] sm:$0xff]
    %v30 = vld [vmem:[%s1 + $0x70] sm:$0xff]
    %v31 = vld [vmem:[%s1 + $0x78] sm:$0xff]
    %v32 = vld [vmem:[%s1 + $0x80] sm:$0xff]
    %v33 = vld [vmem:[%s1 + $0x88] sm:$0xff]
    %v34 = vld [vmem:[%s1 + $0x90] sm:$0xff]
    %v35 = vld [vmem:[%s1 + $0x98] sm:$0xff]
    %v36 = vld [vmem:[%s1 + $0xa0] sm:$0xff]
    %v37 = vld [vmem:[%s1 + $0xa8] sm:$0xff]
    %v38 = vld [vmem:[%s1 + $0xb0] sm:$0xff]
    %v39 = vld [vmem:[%s1 + $0xb8] sm:$0xff]
    %v40 = vld [vmem:[%s1 + $0xc0] sm:$0xff]
    %v41 = vld [vmem:[%s1 + $0xc8] sm:$0xff]
    %v42 = vld [vmem:[%s1 + $0xd0] sm:$0xff]
    %v43 = vld [vmem:[%s1 + $0xd8] sm:$0xff]
    %v44 = vld [vmem:[%s1 + $0xe0] sm:$0xff]
    %v45 = vld [vmem:[%s1 + $0xe8] sm:$0xff]
    %v46 = vld [vmem:[%s1 + $0xf0] sm:$0xff]
    %v47 = vld [vmem:[%s1 + $0xf8] sm:$0xff]
    %v48 = vld [vmem:[%s1 + $0x100] sm:$0xff]
    %v49 = vld [vmem:[%s1 + $0x108] sm:$0xff]
    %v50 = vld [vmem:[%s1 + $0x110] sm:$0xff]
    %v51 = vld [vmem:[%s1 + $0x118] sm:$0xff]
    %v52 = vld [vmem:[%s2] sm:$0x1]
    %v54 = vlaneseq
    %v55 = vshrl.u32 %v54, 7
    %v56 = vsub.s32 0, %v55
    %v57 = vrot.slane %v52, %v56
    %v60 = vcombine.high %v15, %v15
    %v62 = vunpack.c.l.s4 1983009808
    %v63 = vunpack.c.0.s8 %v62
    %v64 = vlaneseq
    %v65 = vshrl.u32 %v64, 7
    %v66 = vsub.s32 %v63, %v65
    %v67 = vrot.slane %v15, %v66
    %v69 = vunpack.c.l.s4 1983009808
    %v70 = vunpack.c.0.s8 %v69
    %v71 = vlaneseq
    %v72 = vshrl.u32 %v71, 7
    %v73 = vsub.s32 %v70, %v72
    %v74 = vrot.slane %v60, %v73
    %v75 = vcombine.high %v67, %v67
    %vm78 = vcmask 261120
    %v79 = vsel %vm78, %v74, 0
    %81 = vmatprep.subr.mxu0 0.0
    %82 = vmatpush1.msra.mxu0 %v31
    %83 = vmatprep.subr.mxu0 0.0
    %84 = vmatpush1.msra.mxu0 %v30
    %85 = vmatprep.subr.mxu0 0.0
    %86 = vmatpush1.msra.mxu0 %v29
    %87 = vmatprep.subr.mxu0 0.0
    %88 = vmatpush1.msra.mxu0 %v28
    %89 = vmatprep.subr.mxu0 0.0
    %90 = vmatpush1.msra.mxu0 %v27
    %91 = vmatprep.subr.mxu0 0.0
    %92 = vmatpush1.msra.mxu0 %v26
    %93 = vmatprep.subr.mxu0 0.0
    %94 = vmatpush1.msra.mxu0 %v25
    %95 = vmatprep.subr.mxu0 0.0
    %96 = vmatpush1.msra.mxu0 %v24
    %97 = vmatprep.subr.mxu0 0.0
    %98 = vmatpush1.msra.mxu0 %v23
    %99 = vmatprep.subr.mxu0 0.0
    %100 = vmatpush1.msra.mxu0 %v22
    %101 = vmatprep.subr.mxu0 0.0
    %102 = vmatpush1.msra.mxu0 %v21
    %103 = vmatprep.subr.mxu0 0.0
    %104 = vmatpush1.msra.mxu0 %v20
    %105 = vmatprep.subr.mxu0 0.0
    %106 = vmatpush1.msra.mxu0 %v19
    %107 = vmatprep.subr.mxu0 0.0
    %108 = vmatpush1.msra.mxu0 %v18
    %109 = vmatprep.subr.mxu0 0.0
    %110 = vmatpush1.msra.mxu0 %v17
    %111 = vmatprep.subr.mxu0 0.0
    %112 = vmatpush1.msra.mxu0 %v16
    %113 = vmatprep.subr.mxu0 0.0
    %114 = vmatpush2.msra.mxu0 %v47
    %115 = vmatprep.subr.mxu0 0.0
    %116 = vmatpush2.msra.mxu0 %v46
    %117 = vmatprep.subr.mxu0 0.0
    %118 = vmatpush2.msra.mxu0 %v45
    %119 = vmatprep.subr.mxu0 0.0
    %120 = vmatpush2.msra.mxu0 %v44
    %121 = vmatprep.subr.mxu0 0.0
    %122 = vmatpush2.msra.mxu0 %v43
    %123 = vmatprep.subr.mxu0 0.0
    %124 = vmatpush2.msra.mxu0 %v42
    %125 = vmatprep.subr.mxu0 0.0
    %126 = vmatpush2.msra.mxu0 %v41
    %127 = vmatprep.subr.mxu0 0.0
    %128 = vmatpush2.msra.mxu0 %v40
    %129 = vmatprep.subr.mxu0 0.0
    %130 = vmatpush2.msra.mxu0 %v39
    %131 = vmatprep.subr.mxu0 0.0
    %132 = vmatpush2.msra.mxu0 %v38
    %133 = vmatprep.subr.mxu0 0.0
    %134 = vmatpush2.msra.mxu0 %v37
    %135 = vmatprep.subr.mxu0 0.0
    %136 = vmatpush2.msra.mxu0 %v36
    %137 = vmatprep.subr.mxu0 0.0
    %138 = vmatpush2.msra.mxu0 %v35
    %139 = vmatprep.subr.mxu0 0.0
    %140 = vmatpush2.msra.mxu0 %v34
    %141 = vmatprep.subr.mxu0 0.0
    %142 = vmatpush2.msra.mxu0 %v33
    %143 = vmatprep.subr.mxu0 0.0
    %144 = vmatpush2.msra.mxu0 %v32
    %145 = vmatprep.mubr.f32.mxu0 %v75
    %146 = vmatmul.mubr.f32.gmra.mxu0 %v67
    %v147 = vpop.f32.mrf.mxu0
    %v148 = vadd.f32 %v57, %v147
    %v149 = vpop.f32.mrf.mxu0
    %150 = vdwg.mxu0
    %151 = vmatprep.subr.mxu0 0.0
    %152 = vmatpush1.msra.mxu0 0.0
    %153 = vmatprep.subr.mxu0 0.0
    %154 = vmatpush1.msra.mxu0 0.0
    %155 = vmatprep.subr.mxu0 0.0
    %156 = vmatpush1.msra.mxu0 0.0
    %157 = vmatprep.subr.mxu0 0.0
    %158 = vmatpush1.msra.mxu0 0.0
    %159 = vmatprep.subr.mxu0 0.0
    %160 = vmatpush1.msra.mxu0 0.0
    %161 = vmatprep.subr.mxu0 0.0
    %162 = vmatpush1.msra.mxu0 0.0
    %163 = vmatprep.subr.mxu0 0.0
    %164 = vmatpush1.msra.mxu0 0.0
    %165 = vmatprep.subr.mxu0 0.0
    %166 = vmatpush1.msra.mxu0 0.0
    %167 = vmatprep.subr.mxu0 0.0
    %168 = vmatpush1.msra.mxu0 0.0
    %169 = vmatprep.subr.mxu0 0.0
    %170 = vmatpush1.msra.mxu0 0.0
    %171 = vmatprep.subr.mxu0 0.0
    %172 = vmatpush1.msra.mxu0 0.0
    %173 = vmatprep.subr.mxu0 0.0
    %174 = vmatpush1.msra.mxu0 0.0
    %175 = vmatprep.subr.mxu0 0.0
    %176 = vmatpush1.msra.mxu0 %v51
    %177 = vmatprep.subr.mxu0 0.0
    %178 = vmatpush1.msra.mxu0 %v50
    %179 = vmatprep.subr.mxu0 0.0
    %180 = vmatpush1.msra.mxu0 %v49
    %181 = vmatprep.subr.mxu0 0.0
    %182 = vmatpush1.msra.mxu0 %v48
    %183 = vmatprep.subr.mxu0 0.0
    %184 = vmatpush2.msra.mxu0 0.0
    %185 = vmatprep.subr.mxu0 0.0
    %186 = vmatpush2.msra.mxu0 0.0
    %187 = vmatprep.subr.mxu0 0.0
    %188 = vmatpush2.msra.mxu0 0.0
    %189 = vmatprep.subr.mxu0 0.0
    %190 = vmatpush2.msra.mxu0 0.0
    %191 = vmatprep.subr.mxu0 0.0
    %192 = vmatpush2.msra.mxu0 0.0
    %193 = vmatprep.subr.mxu0 0.0
    %194 = vmatpush2.msra.mxu0 0.0
    %195 = vmatprep.subr.mxu0 0.0
    %196 = vmatpush2.msra.mxu0 0.0
    %197 = vmatprep.subr.mxu0 0.0
    %198 = vmatpush2.msra.mxu0 0.0
    %199 = vmatprep.subr.mxu0 0.0
    %200 = vmatpush2.msra.mxu0 0.0
    %201 = vmatprep.subr.mxu0 0.0
    %202 = vmatpush2.msra.mxu0 0.0
    %203 = vmatprep.subr.mxu0 0.0
    %204 = vmatpush2.msra.mxu0 0.0
    %205 = vmatprep.subr.mxu0 0.0
    %206 = vmatpush2.msra.mxu0 0.0
    %207 = vmatprep.subr.mxu0 0.0
    %208 = vmatpush2.msra.mxu0 0.0
    %209 = vmatprep.subr.mxu0 0.0
    %210 = vmatpush2.msra.mxu0 0.0
    %211 = vmatprep.subr.mxu0 0.0
    %212 = vmatpush2.msra.mxu0 0.0
    %213 = vmatprep.subr.mxu0 0.0
    %214 = vmatpush2.msra.mxu0 0.0
    %215 = vmatprep.mubr.f32.mxu0 0.0
    %216 = vmatmul.mubr.f32.gmra.mxu0 %v79
    %v217 = vpop.f32.mrf.mxu0
    %v218 = vadd.f32 %v148, %v217
    %v219 = vpop.f32.mrf.mxu0
    %220 = vdwg.mxu0
    %v221 = vtanh.pop %v218
    %vm222 = vcmask 254976
    %223 = vst.msk [vmem:[#allocation2] sm:$0x3] %vm222, %v221
    // Predicated region
    $region14: #{tpu_custom_call.1} parent=1 // pred_check
      _
    $region15: #{tpu_custom_call.1} parent=1 // pred_check_branch
      %225 = sbr.rel (0) target = $region17
    $region16: #{tpu_custom_call.1} parent=1 // pred_region
      %s227 = ssub.s32 32, 32
      %228 = vsyncadd [#allocation3], %s227
      %s230 = sshll.u32 [#allocation2], 4
      %s231 = int_to_ptr.vmem [resolvable:$true] %s230
      %233 = dma.vmem_to_hbm [thread:$0]  %s231, 32, %s3, [#allocation3]
    $region17: #{tpu_custom_call.1} parent=1 // pred_fallthru
      _
    // Predicated region
    $region18: #{tpu_custom_call.1} parent=1 // pred_check
      _
    $region19: #{tpu_custom_call.1} parent=1 // pred_check_branch
      %235 = sbr.rel (0) target = $region21
    $region20: #{tpu_custom_call.1} parent=1 // pred_region
      %236 = dma.done [#allocation3], 32
    $region21: #{tpu_custom_call.1} parent=1 // pred_fallthru
      _
    %237 = vsyncpa [#allocation3], 1

</llo_original>
